<compile_context>
chip_gen: v7x
topology: tpu7x:2x2x1
jax: 0.10.0
libtpu: 0.0.40
codegen_flags: <defaults>
</compile_context>

<pallas_src>
import math

import jax
import jax.numpy as jnp
from jax.experimental import pallas as pl
from jax.experimental.pallas import tpu as pltpu


def _round_up(a, m):
    return (a + m - 1) // m * m


# ----------------------------------------------------------------------------
# Shared glue: coordinates + data-dependent gather (stays in XLA)
# ----------------------------------------------------------------------------
def _deform_samples(x, offset, kernel_size):
    """Corner samples and fractions for every (batch, out-pixel, kernel-tap).

    Returns (v_lt, v_rt, v_lb, v_rb) each (B, C, H, W, K*K) f32 with
    out-of-image corners zeroed, plus (frac_i, frac_j) each (B, H, W, K*K) f32.
    """
    b, c, h, w = x.shape
    k = kernel_size
    k2 = k * k

    # base sampling grid: coord[i, j, ki*k+kj] = (i + ki - k//2, j + kj - k//2)
    low = -(k // 2)
    di = jnp.arange(low, low + k, dtype=jnp.float32)
    base_i = (jnp.arange(h, dtype=jnp.float32)[:, None, None, None]
              + di[None, None, :, None])                          # (h,1,k,1)
    base_j = (jnp.arange(w, dtype=jnp.float32)[None, :, None, None]
              + di[None, None, None, :])                          # (1,w,1,k)
    base_i = jnp.broadcast_to(base_i, (h, w, k, k)).reshape(h, w, k2)
    base_j = jnp.broadcast_to(base_j, (h, w, k, k)).reshape(h, w, k2)

    # offset: (B, 2*K2, H, W) -> (B, H, W, K2, 2); [...,0]=i-off, [...,1]=j-off
    off = offset.reshape(b, k2, 2, h, w).transpose(0, 3, 4, 1, 2)
    coord_i = off[..., 0] + base_i[None]                          # (b,h,w,k2)
    coord_j = off[..., 1] + base_j[None]

    lt_i = jnp.floor(coord_i)
    lt_j = jnp.floor(coord_j)
    rb_i = jnp.ceil(coord_i)
    rb_j = jnp.ceil(coord_j)
    frac_i = coord_i - lt_i
    frac_j = coord_j - lt_j

    # TODO(synk): the data-dependent gather (PyTorch index_select) stays in XLA
    # glue; fusing it into the Pallas kernel would need per-element VMEM gathers
    # or a manual-DMA paging scheme that BlockSpec index_maps cannot express.
    x_flat = x.reshape(b, c, h * w)

    def sample(ci, cj):
        ci = ci.astype(jnp.int32)
        cj = cj.astype(jnp.int32)
        inside = ((ci >= 0) & (ci < h) & (cj >= 0) & (cj < w)).astype(x.dtype)
        flat = jnp.clip(ci, 0, h - 1) * w + jnp.clip(cj, 0, w - 1)  # (b,h,w,k2)

        def one(xb, idx):          # xb: (c, h*w), idx: (h, w, k2)
            return jnp.take(xb, idx.reshape(-1), axis=1).reshape(c, h, w, k2)

        return jax.vmap(one)(x_flat, flat) * inside[:, None]       # zero outside

    return (sample(lt_i, lt_j), sample(lt_i, rb_j),
            sample(rb_i, lt_j), sample(rb_i, rb_j), frac_i, frac_j)


# ----------------------------------------------------------------------------
# Pallas kernel: bilinear blend (VPU, f32) + im2col matmul (MXU, bf16 -> f32)
# ----------------------------------------------------------------------------
def _make_kernel(k2, c_pad):
    ckk = k2 * c_pad

    def kernel(w_ref, lt_ref, rt_ref, lb_ref, rb_ref, fh_ref, fw_ref, o_ref):
        tn = fw_ref.shape[-1]

        def bcast(f):  # (k2, 1, tn) -> (k2*c_pad, tn); row = kk*c_pad + ci
            return jnp.broadcast_to(f, (k2, c_pad, tn)).reshape(ckk, tn)

        fw = bcast(fw_ref[...])
        fh = bcast(fh_ref[...])

        # corners arrive as bf16 (halved HBM traffic); blend in f32 (v5e-safe).
        lt = lt_ref[...].astype(jnp.float32)
        rt = rt_ref[...].astype(jnp.float32)
        lb = lb_ref[...].astype(jnp.float32)
        rb = rb_ref[...].astype(jnp.float32)

        top = lt + fw * (rt - lt)
        bot = lb + fw * (rb - lb)
        mapped = top + fh * (bot - top)                            # (ckk, tn) f32

        o_ref[...] = jnp.dot(w_ref[...], mapped.astype(jnp.bfloat16),
                             preferred_element_type=jnp.float32
                             ).astype(o_ref.dtype)

    return kernel


# ----------------------------------------------------------------------------
# Glue: pack corner samples / fractions into kernel-friendly column matrices
# ----------------------------------------------------------------------------
def _build_kernel_inputs(x, offset, kernel_size, c_pad):
    b, c, h, w = x.shape
    k2 = kernel_size * kernel_size
    n = b * h * w

    v_lt, v_rt, v_lb, v_rb, frac_i, frac_j = _deform_samples(x, offset, kernel_size)

    def to_cols(v):  # (b,c,h,w,k2) -> (k2*c_pad, b*h*w) bf16, row = kk*c_pad+ci
        v = v.transpose(4, 1, 0, 2, 3).reshape(k2, c, n)
        v = jnp.pad(v, ((0, 0), (0, c_pad - c), (0, 0)))
        return v.reshape(k2 * c_pad, n).astype(jnp.bfloat16)

    def to_frac(f):  # (b,h,w,k2) -> (k2, 1, b*h*w) f32
        return f.transpose(3, 0, 1, 2).reshape(k2, 1, n).astype(jnp.float32)

    return ((to_cols(v_lt), to_cols(v_rt), to_cols(v_lb), to_cols(v_rb)),
            to_frac(frac_i), to_frac(frac_j))


# ----------------------------------------------------------------------------
# Wrapper (DeformConv.forward equivalent)
# ----------------------------------------------------------------------------
def deform_conv_forward(x, offset, weight, kernel_size=3, tile_n=512,
                        vmem_limit_bytes=48 * 1024 * 1024):
    b, c, h, w = x.shape
    out_c = weight.shape[0]
    k = kernel_size
    k2 = k * k
    n = b * h * w

    c_pad = _round_up(c, 8)        # sublane-aligned channel padding
    oc_pad = _round_up(out_c, 8)   # sublane-aligned output-channel padding
    ckk = k2 * c_pad

    # VMEM-aware tile clamp: 2-deep buffering of all column streams must fit
    # comfortably inside the scoped VMEM budget (safe for v7x's 64 MiB too).
    per_col_bytes = 2 * (4 * ckk * 2 + 2 * k2 * 4 + oc_pad * 4)
    max_tile = max(128, ((vmem_limit_bytes * 3 // 4) // per_col_bytes) // 128 * 128)
    tile_n = min(max(128, tile_n // 128 * 128), max_tile, _round_up(n, 128))

    n_pad = pl.cdiv(n, tile_n) * tile_n

    (lt, rt, lb, rb), fh, fw = _build_kernel_inputs(x, offset, k, c_pad)

    pad = n_pad - n
    if pad:
        lt, rt, lb, rb = (jnp.pad(a, ((0, 0), (0, pad))) for a in (lt, rt, lb, rb))
        fh = jnp.pad(fh, ((0, 0), (0, 0), (0, pad)))
        fw = jnp.pad(fw, ((0, 0), (0, 0), (0, pad)))

    # weight: (oc, c, k, k) -> (oc_pad, k2*c_pad) bf16, col = kk*c_pad + ci
    w_r = weight.reshape(out_c, c, k2).transpose(0, 2, 1)          # (oc, k2, c)
    w_r = jnp.pad(w_r, ((0, oc_pad - out_c), (0, 0), (0, c_pad - c)))
    w2d = w_r.reshape(oc_pad, ckk).astype(jnp.bfloat16)

    col_spec = pl.BlockSpec((ckk, tile_n), lambda i: (0, i))        # bf16 corners
    frac_spec = pl.BlockSpec((k2, 1, tile_n), lambda i: (0, 0, i))  # f32 fracs

    out = pl.pallas_call(
        _make_kernel(k2, c_pad),
        out_shape=jax.ShapeDtypeStruct((oc_pad, n_pad), jnp.float32),
        grid_spec=pltpu.PrefetchScalarGridSpec(
            num_scalar_prefetch=0,
            grid=(n_pad // tile_n,),
            in_specs=[
                pl.BlockSpec((oc_pad, ckk), lambda i: (0, 0)),  # weight, resident
                col_spec,   # lt
                col_spec,   # rt
                col_spec,   # lb
                col_spec,   # rb
                frac_spec,  # fh (K*K rows only; broadcast over C in-kernel)
                frac_spec,  # fw
            ],
            out_specs=pl.BlockSpec((oc_pad, tile_n), lambda i: (0, i)),
        ),
        compiler_params=pltpu.CompilerParams(
            dimension_semantics=("parallel",),
            vmem_limit_bytes=vmem_limit_bytes),
    )(w2d, lt, rt, lb, rb, fh, fw)

    out = out[:out_c, :n].reshape(out_c, b, h, w).transpose(1, 0, 2, 3)  # NCHW
    return out


# ----------------------------------------------------------------------------
# Pure-JAX f32 reference (direct einsum path, no column packing / no bf16)
# ----------------------------------------------------------------------------
def _reference_forward(x, offset, weight, kernel_size=3):
    b, c, h, w = x.shape
    out_c = weight.shape[0]
    k2 = kernel_size * kernel_size

    v_lt, v_rt, v_lb, v_rb, frac_i, frac_j = _deform_samples(x, offset, kernel_size)
    fj = frac_j[:, None]   # (b,1,h,w,k2)
    fi = frac_i[:, None]
    top = v_lt + fj * (v_rt - v_lt)
    bot = v_lb + fj * (v_rb - v_lb)
    mapped = top + fi * (bot - top)                                # (b,c,h,w,k2)
    return jnp.einsum('ocp,bchwp->bohw', weight.reshape(out_c, c, k2), mapped,
                      precision=jax.lax.Precision.HIGHEST)


if __name__ == "__main__":
    key = jax.random.PRNGKey(0)
    b, c, h, w = 2, 4, 16, 16
    out_c, k = 8, 3

    k_x, k_off, k_w = jax.random.split(key, 3)
    x = jax.random.normal(k_x, (b, c, h, w), dtype=jnp.float32)
    offset = 0.5 * jax.random.normal(k_off, (b, 2 * k * k, h, w), dtype=jnp.float32)

    # deterministic init matching reset_parameters(): U(-stdv, stdv), stdv=1/sqrt(C*K*K)
    stdv = 1.0 / math.sqrt(c * k * k)
    weight = jax.random.uniform(k_w, (out_c, c, k, k), dtype=jnp.float32,
                                minval=-stdv, maxval=stdv)

    out = deform_conv_forward(x, offset, weight, kernel_size=k)
    out = jax.block_until_ready(out)

    assert out.shape == (b, out_c, h, w), out.shape
    ref = _reference_forward(x, offset, weight, kernel_size=k)
    # bf16 corner/weight streams -> tolerance wider than a pure-f32 comparison.
    err = float(jnp.max(jnp.abs(out - ref)))
    assert jnp.allclose(out, ref, rtol=3e-2, atol=3e-2), err

    print("KERNEL_OK")
</pallas_src>

<mosaic_0001>
module attributes {stable_mosaic.version = 11 : i64} {
  func.func @kernel(%arg0: i32, %arg1: memref<8x72xbf16, #tpu.memory_space<vmem>>, %arg2: memref<72x512xbf16, #tpu.memory_space<vmem>>, %arg3: memref<72x512xbf16, #tpu.memory_space<vmem>>, %arg4: memref<72x512xbf16, #tpu.memory_space<vmem>>, %arg5: memref<72x512xbf16, #tpu.memory_space<vmem>>, %arg6: memref<9x1x512xf32, #tpu.memory_space<vmem>>, %arg7: memref<9x1x512xf32, #tpu.memory_space<vmem>>, %arg8: memref<8x512xf32, #tpu.memory_space<vmem>>) attributes {dimension_semantics = [#tpu.dimension_semantics<parallel>], iteration_bounds = array<i64: 1>, scalar_prefetch = 0 : i64, scratch_operands = 0 : i64, tpu.core_type = #tpu.core_type<tc>, window_params = [{pipeline_mode = #tpu.pipeline_mode<synchronous>, transform_indices = @transform_0, window_bounds = array<i64: 8, 72>}, {transform_indices = @transform_1, window_bounds = array<i64: 72, 512>}, {transform_indices = @transform_2, window_bounds = array<i64: 72, 512>}, {transform_indices = @transform_3, window_bounds = array<i64: 72, 512>}, {transform_indices = @transform_4, window_bounds = array<i64: 72, 512>}, {transform_indices = @transform_5, window_bounds = array<i64: 9, 1, 512>}, {transform_indices = @transform_6, window_bounds = array<i64: 9, 1, 512>}, {transform_indices = @transform_7, window_bounds = array<i64: 8, 512>}]} {
    %c0 = arith.constant 0 : index
    %c0_0 = arith.constant 0 : index
    %c0_1 = arith.constant 0 : index
    %0 = vector.load %arg7[%c0, %c0_0, %c0_1] : memref<9x1x512xf32, #tpu.memory_space<vmem>>, vector<9x1x512xf32>
    %1 = vector.shape_cast %0 : vector<9x1x512xf32> to vector<9x1x512xf32>
    %2 = vector.broadcast %1 : vector<9x1x512xf32> to vector<9x8x512xf32>
    %3 = vector.shape_cast %2 : vector<9x8x512xf32> to vector<72x512xf32>
    %c0_2 = arith.constant 0 : index
    %c0_3 = arith.constant 0 : index
    %c0_4 = arith.constant 0 : index
    %4 = vector.load %arg6[%c0_2, %c0_3, %c0_4] : memref<9x1x512xf32, #tpu.memory_space<vmem>>, vector<9x1x512xf32>
    %5 = vector.shape_cast %4 : vector<9x1x512xf32> to vector<9x1x512xf32>
    %6 = vector.broadcast %5 : vector<9x1x512xf32> to vector<9x8x512xf32>
    %7 = vector.shape_cast %6 : vector<9x8x512xf32> to vector<72x512xf32>
    %c0_5 = arith.constant 0 : index
    %c0_6 = arith.constant 0 : index
    %8 = vector.load %arg2[%c0_5, %c0_6] : memref<72x512xbf16, #tpu.memory_space<vmem>>, vector<72x512xbf16>
    %9 = arith.extf %8 : vector<72x512xbf16> to vector<72x512xf32>
    %c0_7 = arith.constant 0 : index
    %c0_8 = arith.constant 0 : index
    %10 = vector.load %arg3[%c0_7, %c0_8] : memref<72x512xbf16, #tpu.memory_space<vmem>>, vector<72x512xbf16>
    %11 = arith.extf %10 : vector<72x512xbf16> to vector<72x512xf32>
    %c0_9 = arith.constant 0 : index
    %c0_10 = arith.constant 0 : index
    %12 = vector.load %arg4[%c0_9, %c0_10] : memref<72x512xbf16, #tpu.memory_space<vmem>>, vector<72x512xbf16>
    %13 = arith.extf %12 : vector<72x512xbf16> to vector<72x512xf32>
    %c0_11 = arith.constant 0 : index
    %c0_12 = arith.constant 0 : index
    %14 = vector.load %arg5[%c0_11, %c0_12] : memref<72x512xbf16, #tpu.memory_space<vmem>>, vector<72x512xbf16>
    %15 = arith.extf %14 : vector<72x512xbf16> to vector<72x512xf32>
    %16 = arith.subf %11, %9 : vector<72x512xf32>
    %17 = arith.mulf %3, %16 : vector<72x512xf32>
    %18 = arith.addf %9, %17 : vector<72x512xf32>
    %19 = arith.subf %15, %13 : vector<72x512xf32>
    %20 = arith.mulf %3, %19 : vector<72x512xf32>
    %21 = arith.addf %13, %20 : vector<72x512xf32>
    %22 = arith.subf %21, %18 : vector<72x512xf32>
    %23 = arith.mulf %7, %22 : vector<72x512xf32>
    %24 = arith.addf %18, %23 : vector<72x512xf32>
    %c0_13 = arith.constant 0 : index
    %c0_14 = arith.constant 0 : index
    %25 = vector.load %arg1[%c0_13, %c0_14] : memref<8x72xbf16, #tpu.memory_space<vmem>>, vector<8x72xbf16>
    %26 = arith.truncf %24 : vector<72x512xf32> to vector<72x512xbf16>
    %cst = arith.constant dense<0.000000e+00> : vector<8x512xf32>
    %27 = tpu.matmul %25, %26, %cst {dimension_numbers = #tpu.dot_dimension_numbers<[1], [0], [0], [1], [0, 0, 1, 1], [], []>} : vector<8x72xbf16>, vector<72x512xbf16>, vector<8x512xf32> -> vector<8x512xf32>
    %c0_15 = arith.constant 0 : index
    %c0_16 = arith.constant 0 : index
    %28 = vector.load %arg8[%c0_15, %c0_16] : memref<8x512xf32, #tpu.memory_space<vmem>>, vector<8x512xf32>
    tpu.vector_store %arg8[%c0_15, %c0_16], %27 {strides = array<i32>} : memref<8x512xf32, #tpu.memory_space<vmem>>, vector<8x512xf32>,
    return
  }
  func.func @transform_0(%arg0: i32) -> (i32, i32) {
    %c0_i32 = arith.constant 0 : i32
    %c0_i32_0 = arith.constant 0 : i32
    %c0_i32_1 = arith.constant 0 : i32
    return %c0_i32, %c0_i32_0 : i32, i32
  }
  func.func @transform_1(%arg0: i32) -> (i32, i32) {
    %c0_i32 = arith.constant 0 : i32
    %c0_i32_0 = arith.constant 0 : i32
    return %c0_i32, %arg0 : i32, i32
  }
  func.func @transform_2(%arg0: i32) -> (i32, i32) {
    %c0_i32 = arith.constant 0 : i32
    %c0_i32_0 = arith.constant 0 : i32
    return %c0_i32, %arg0 : i32, i32
  }
  func.func @transform_3(%arg0: i32) -> (i32, i32) {
    %c0_i32 = arith.constant 0 : i32
    %c0_i32_0 = arith.constant 0 : i32
    return %c0_i32, %arg0 : i32, i32
  }
  func.func @transform_4(%arg0: i32) -> (i32, i32) {
    %c0_i32 = arith.constant 0 : i32
    %c0_i32_0 = arith.constant 0 : i32
    return %c0_i32, %arg0 : i32, i32
  }
  func.func @transform_5(%arg0: i32) -> (i32, i32, i32) {
    %c0_i32 = arith.constant 0 : i32
    %c0_i32_0 = arith.constant 0 : i32
    %c0_i32_1 = arith.constant 0 : i32
    return %c0_i32, %c0_i32_0, %arg0 : i32, i32, i32
  }
  func.func @transform_6(%arg0: i32) -> (i32, i32, i32) {
    %c0_i32 = arith.constant 0 : i32
    %c0_i32_0 = arith.constant 0 : i32
    %c0_i32_1 = arith.constant 0 : i32
    return %c0_i32, %c0_i32_0, %arg0 : i32, i32, i32
  }
  func.func @transform_7(%arg0: i32) -> (i32, i32) {
    %c0_i32 = arith.constant 0 : i32
    %c0_i32_0 = arith.constant 0 : i32
    return %c0_i32, %arg0 : i32, i32
  }
}

</mosaic_0001>

<llo_original>
// kernel: tpu_custom_call.1
$region0: #{tpu_custom_call.1}
  #allocation0 [shape = 'u32[]', space=smem, size = 0x4, offset = 0x4, fixed_abs, tag = 'smem constant byte address 0x4 - core index']
  #allocation1 [shape = 'u32[144,128]{1,0:T(1,128)}', space=vmem, size = 0x12000, scoped, tag = 'internal scratch']
  %s0 = inlined_call_operand.hbm [shape: bf16[8,72], index: 0, kind: input, shape index: {}]
  %s1 = inlined_call_operand.hbm [shape: bf16[72,512], index: 1, kind: input, shape index: {}]
  %s2 = inlined_call_operand.hbm [shape: bf16[72,512], index: 2, kind: input, shape index: {}]
  %s3 = inlined_call_operand.hbm [shape: bf16[72,512], index: 3, kind: input, shape index: {}]
  %s4 = inlined_call_operand.hbm [shape: bf16[72,512], index: 4, kind: input, shape index: {}]
  %s5 = inlined_call_operand.hbm [shape: f32[9,1,512], index: 5, kind: input, shape index: {}]
  %s6 = inlined_call_operand.hbm [shape: f32[9,1,512], index: 6, kind: input, shape index: {}]
  %s7 = inlined_call_operand.hbm [shape: f32[8,512], index: 7, kind: output, shape index: {}]
  %s8 = sld [smem:[#allocation0]]
  $region66: #{tpu_custom_call.1} parent=0
    _
  %s10 = ssub.s32 1, %s8
  %s11 = scalar_select 0, %s10, %s8
  $region1: #{tpu_custom_call.1} parent=0
    #allocation2 [shape = 'u8[2048]{0}', space=vmem, size = 0x800, scoped, tag = 'input window, operand 0, single buffered']
    #allocation3 [shape = 's32[1]{0}', space=sflag, size = 0x4, scoped, tag = 'scoped memory for tpu_custom_call.1']
    #allocation4 [shape = 's32[1]{0}', space=sflag, size = 0x4, scoped, tag = 'scoped memory for tpu_custom_call.1']
    #allocation5 [shape = 'u8[73728]{0}', space=vmem, size = 0x12000, scoped, tag = 'input window, operand 1, single buffered']
    #allocation6 [shape = 's32[1]{0}', space=sflag, size = 0x4, scoped, tag = 'scoped memory for tpu_custom_call.1']
    #allocation7 [shape = 'u8[73728]{0}', space=vmem, size = 0x12000, scoped, tag = 'input window, operand 2, single buffered']
    #allocation8 [shape = 'u8[73728]{0}', space=vmem, size = 0x12000, scoped, tag = 'input window, operand 3, single buffered']
    #allocation9 [shape = 's32[1]{0}', space=sflag, size = 0x4, scoped, tag = 'scoped memory for tpu_custom_call.1']
    #allocation10 [shape = 'u8[73728]{0}', space=vmem, size = 0x12000, scoped, tag = 'input window, operand 4, single buffered']
    #allocation11 [shape = 'u8[18432]{0}', space=vmem, size = 0x4800, scoped, tag = 'input window, operand 5, single buffered']
    #allocation12 [shape = 's32[1]{0}', space=sflag, size = 0x4, scoped, tag = 'scoped memory for tpu_custom_call.1']
    #allocation13 [shape = 'u8[18432]{0}', space=vmem, size = 0x4800, scoped, tag = 'input window, operand 6, single buffered']
    #allocation14 [shape = 'u8[16384]{0}', space=vmem, size = 0x4000, scoped, tag = 'output window, operand 0, single buffered']
    %12 = vsyncpa [#allocation3], 0
    %13 = vsyncpa [#allocation6], 0
    %14 = vsyncpa [#allocation9], 0
    %15 = vsyncpa [#allocation12], 0
    %16 = vsyncpa [#allocation4], 0
    // Predicated region
    $region2: #{tpu_custom_call.1} parent=1 // pred_check
      _
    $region3: #{tpu_custom_call.1} parent=1 // pred_check_branch
      %18 = sbr.rel (0) target = $region5
    $region4: #{tpu_custom_call.1} parent=1 // pred_region
      %s20 = ssub.s32 64, 64
      %21 = vsyncadd [#allocation3], %s20
      %s23 = sshll.u32 [#allocation2], 4
      %s24 = int_to_ptr.vmem [resolvable:$true] %s23
      %26 = dma.hbm_to_vmem [thread:$0]  %s0, 64, %s24, [#allocation3]
    $region5: #{tpu_custom_call.1} parent=1 // pred_fallthru
      _
    // Predicated region
    $region6: #{tpu_custom_call.1} parent=1 // pred_check
      _
    $region7: #{tpu_custom_call.1} parent=1 // pred_check_branch
      %28 = sbr.rel (0) target = $region9
    $region8: #{tpu_custom_call.1} parent=1 // pred_region
      %s30 = ssub.s32 2304, 2304
      %31 = vsyncadd [#allocation6], %s30
      %s32 = sshll.u32 [#allocation5], 4
      %s33 = int_to_ptr.vmem [resolvable:$true] %s32
      %38 = dma.hbm_to_vmem [thread:$0]  %s1, 2304, %s33, [#allocation6], 256, 256, 16
    $region9: #{tpu_custom_call.1} parent=1 // pred_fallthru
      _
    // Predicated region
    $region10: #{tpu_custom_call.1} parent=1 // pred_check
      _
    $region11: #{tpu_custom_call.1} parent=1 // pred_check_branch
      %40 = sbr.rel (0) target = $region13
    $region12: #{tpu_custom_call.1} parent=1 // pred_region
      %s42 = ssub.s32 2304, 2304
      %43 = vsyncadd [#allocation6], %s42
      %s44 = sshll.u32 [#allocation7], 4
      %s45 = int_to_ptr.vmem [resolvable:$true] %s44
      %50 = dma.hbm_to_vmem [thread:$0]  %s2, 2304, %s45, [#allocation6], 256, 256, 16
    $region13: #{tpu_custom_call.1} parent=1 // pred_fallthru
      _
    // Predicated region
    $region14: #{tpu_custom_call.1} parent=1 // pred_check
      _
    $region15: #{tpu_custom_call.1} parent=1 // pred_check_branch
      %52 = sbr.rel (0) target = $region17
    $region16: #{tpu_custom_call.1} parent=1 // pred_region
      %s54 = ssub.s32 2304, 2304
      %55 = vsyncadd [#allocation9], %s54
      %s56 = sshll.u32 [#allocation8], 4
      %s57 = int_to_ptr.vmem [resolvable:$true] %s56
      %62 = dma.hbm_to_vmem [thread:$0]  %s3, 2304, %s57, [#allocation9], 256, 256, 16
    $region17: #{tpu_custom_call.1} parent=1 // pred_fallthru
      _
    // Predicated region
    $region18: #{tpu_custom_call.1} parent=1 // pred_check
      _
    $region19: #{tpu_custom_call.1} parent=1 // pred_check_branch
      %64 = sbr.rel (0) target = $region21
    $region20: #{tpu_custom_call.1} parent=1 // pred_region
      %s66 = ssub.s32 2304, 2304
      %67 = vsyncadd [#allocation9], %s66
      %s68 = sshll.u32 [#allocation10], 4
      %s69 = int_to_ptr.vmem [resolvable:$true] %s68
      %74 = dma.hbm_to_vmem [thread:$0]  %s4, 2304, %s69, [#allocation9], 256, 256, 16
    $region21: #{tpu_custom_call.1} parent=1 // pred_fallthru
      _
    // Predicated region
    $region22: #{tpu_custom_call.1} parent=1 // pred_check
      _
    $region23: #{tpu_custom_call.1} parent=1 // pred_check_branch
      %76 = sbr.rel (0) target = $region25
    $region24: #{tpu_custom_call.1} parent=1 // pred_region
      %s78 = ssub.s32 576, 576
      %79 = vsyncadd [#allocation12], %s78
      %s80 = sshll.u32 [#allocation11], 4
      %s81 = int_to_ptr.vmem [resolvable:$true] %s80
      %86 = dma.hbm_to_vmem [thread:$0]  %s5, 576, %s81, [#allocation12], 64, 64, 4
    $region25: #{tpu_custom_call.1} parent=1 // pred_fallthru
      _
    // Predicated region
    $region26: #{tpu_custom_call.1} parent=1 // pred_check
      _
    $region27: #{tpu_custom_call.1} parent=1 // pred_check_branch
      %88 = sbr.rel (0) target = $region29
    $region28: #{tpu_custom_call.1} parent=1 // pred_region
      %s90 = ssub.s32 576, 576
      %91 = vsyncadd [#allocation12], %s90
      %s92 = sshll.u32 [#allocation13], 4
      %s93 = int_to_ptr.vmem [resolvable:$true] %s92
      %98 = dma.hbm_to_vmem [thread:$0]  %s6, 576, %s93, [#allocation12], 64, 64, 4
    $region29: #{tpu_custom_call.1} parent=1 // pred_fallthru
      _
    // Predicated region
    $region30: #{tpu_custom_call.1} parent=1 // pred_check
      _
    $region31: #{tpu_custom_call.1} parent=1 // pred_check_branch
      %100 = sbr.rel (0) target = $region33
    $region32: #{tpu_custom_call.1} parent=1 // pred_region
      %101 = dma.done [#allocation3], 64
    $region33: #{tpu_custom_call.1} parent=1 // pred_fallthru
      _
    // Predicated region
    $region34: #{tpu_custom_call.1} parent=1 // pred_check
      _
    $region35: #{tpu_custom_call.1} parent=1 // pred_check_branch
      %103 = sbr.rel (0) target = $region37
    $region36: #{tpu_custom_call.1} parent=1 // pred_region
      %104 = dma.done [#allocation6], 2304
    $region37: #{tpu_custom_call.1} parent=1 // pred_fallthru
      _
    // Predicated region
    $region38: #{tpu_custom_call.1} parent=1 // pred_check
      _
    $region39: #{tpu_custom_call.1} parent=1 // pred_check_branch
      %106 = sbr.rel (0) target = $region41
    $region40: #{tpu_custom_call.1} parent=1 // pred_region
      %107 = dma.done [#allocation6], 2304
    $region41: #{tpu_custom_call.1} parent=1 // pred_fallthru
      _
    // Predicated region
    $region42: #{tpu_custom_call.1} parent=1 // pred_check
      _
    $region43: #{tpu_custom_call.1} parent=1 // pred_check_branch
      %109 = sbr.rel (0) target = $region45
    $region44: #{tpu_custom_call.1} parent=1 // pred_region
      %110 = dma.done [#allocation9], 2304
    $region45: #{tpu_custom_call.1} parent=1 // pred_fallthru
      _
    // Predicated region
    $region46: #{tpu_custom_call.1} parent=1 // pred_check
      _
    $region47: #{tpu_custom_call.1} parent=1 // pred_check_branch
      %112 = sbr.rel (0) target = $region49
    $region48: #{tpu_custom_call.1} parent=1 // pred_region
      %113 = dma.done [#allocation9], 2304
    $region49: #{tpu_custom_call.1} parent=1 // pred_fallthru
      _
    // Predicated region
    $region50: #{tpu_custom_call.1} parent=1 // pred_check
      _
    $region51: #{tpu_custom_call.1} parent=1 // pred_check_branch
      %115 = sbr.rel (0) target = $region53
    $region52: #{tpu_custom_call.1} parent=1 // pred_region
      %116 = dma.done [#allocation12], 576
    $region53: #{tpu_custom_call.1} parent=1 // pred_fallthru
      _
    // Predicated region
    $region54: #{tpu_custom_call.1} parent=1 // pred_check
      _
    $region55: #{tpu_custom_call.1} parent=1 // pred_check_branch
      %118 = sbr.rel (0) target = $region57
    $region56: #{tpu_custom_call.1} parent=1 // pred_region
      %119 = dma.done [#allocation12], 576
    $region57: #{tpu_custom_call.1} parent=1 // pred_fallthru
      _
    %v121 = vld [vmem:[#allocation13] sm:$0xf]
    %v122 = vld [vmem:[#allocation13 + $0x4] sm:$0xf]
    %v123 = vld [vmem:[#allocation13 + $0x8] sm:$0xf]
    %v124 = vld [vmem:[#allocation13 + $0xc] sm:$0xf]
    %v125 = vld [vmem:[#allocation13 + $0x10] sm:$0xf]
    %v126 = vld [vmem:[#allocation13 + $0x14] sm:$0xf]
    %v127 = vld [vmem:[#allocation13 + $0x18] sm:$0xf]
    %v128 = vld [vmem:[#allocation13 + $0x1c] sm:$0xf]
    %v129 = vld [vmem:[#allocation13 + $0x20] sm:$0xf]
    %v139 = vlaneseq
    %v140 = vshrl.u32 %v139, 7
    %v141 = vsub.s32 0, %v140
    %v142 = vrot.slane %v121, %v141
    %v143 = vlaneseq
    %v144 = vshrl.u32 %v143, 7
    %v145 = vsub.s32 1, %v144
    %v146 = vrot.slane %v121, %v145
    %v147 = vlaneseq
    %v148 = vshrl.u32 %v147, 7
    %v149 = vsub.s32 2, %v148
    %v150 = vrot.slane %v121, %v149
    %v151 = vlaneseq
    %v152 = vshrl.u32 %v151, 7
    %v153 = vsub.s32 3, %v152
    %v154 = vrot.slane %v121, %v153
    %v155 = vlaneseq
    %v156 = vshrl.u32 %v155, 7
    %v157 = vsub.s32 0, %v156
    %v158 = vrot.slane %v122, %v157
    %v159 = vlaneseq
    %v160 = vshrl.u32 %v159, 7
    %v161 = vsub.s32 1, %v160
    %v162 = vrot.slane %v122, %v161
    %v163 = vlaneseq
    %v164 = vshrl.u32 %v163, 7
    %v165 = vsub.s32 2, %v164
    %v166 = vrot.slane %v122, %v165
    %v167 = vlaneseq
    %v168 = vshrl.u32 %v167, 7
    %v169 = vsub.s32 3, %v168
    %v170 = vrot.slane %v122, %v169
    %v171 = vlaneseq
    %v172 = vshrl.u32 %v171, 7
    %v173 = vsub.s32 0, %v172
    %v174 = vrot.slane %v123, %v173
    %v175 = vlaneseq
    %v176 = vshrl.u32 %v175, 7
    %v177 = vsub.s32 1, %v176
    %v178 = vrot.slane %v123, %v177
    %v179 = vlaneseq
    %v180 = vshrl.u32 %v179, 7
    %v181 = vsub.s32 2, %v180
    %v182 = vrot.slane %v123, %v181
    %v183 = vlaneseq
    %v184 = vshrl.u32 %v183, 7
    %v185 = vsub.s32 3, %v184
    %v186 = vrot.slane %v123, %v185
    %v187 = vlaneseq
    %v188 = vshrl.u32 %v187, 7
    %v189 = vsub.s32 0, %v188
    %v190 = vrot.slane %v124, %v189
    %v191 = vlaneseq
    %v192 = vshrl.u32 %v191, 7
    %v193 = vsub.s32 1, %v192
    %v194 = vrot.slane %v124, %v193
    %v195 = vlaneseq
    %v196 = vshrl.u32 %v195, 7
    %v197 = vsub.s32 2, %v196
    %v198 = vrot.slane %v124, %v197
    %v199 = vlaneseq
    %v200 = vshrl.u32 %v199, 7
    %v201 = vsub.s32 3, %v200
    %v202 = vrot.slane %v124, %v201
    %v203 = vlaneseq
    %v204 = vshrl.u32 %v203, 7
    %v205 = vsub.s32 0, %v204
    %v206 = vrot.slane %v125, %v205
    %v207 = vlaneseq
    %v208 = vshrl.u32 %v207, 7
    %v209 = vsub.s32 1, %v208
    %v210 = vrot.slane %v125, %v209
    %v211 = vlaneseq
    %v212 = vshrl.u32 %v211, 7
    %v213 = vsub.s32 2, %v212
    %v214 = vrot.slane %v125, %v213
    %v215 = vlaneseq
    %v216 = vshrl.u32 %v215, 7
    %v217 = vsub.s32 3, %v216
    %v218 = vrot.slane %v125, %v217
    %v219 = vlaneseq
    %v220 = vshrl.u32 %v219, 7
    %v221 = vsub.s32 0, %v220
    %v222 = vrot.slane %v126, %v221
    %v223 = vlaneseq
    %v224 = vshrl.u32 %v223, 7
    %v225 = vsub.s32 1, %v224
    %v226 = vrot.slane %v126, %v225
    %v227 = vlaneseq
    %v228 = vshrl.u32 %v227, 7
    %v229 = vsub.s32 2, %v228
    %v230 = vrot.slane %v126, %v229
    %v231 = vlaneseq
    %v232 = vshrl.u32 %v231, 7
    %v233 = vsub.s32 3, %v232
    %v234 = vrot.slane %v126, %v233
    %v235 = vlaneseq
    %v236 = vshrl.u32 %v235, 7
    %v237 = vsub.s32 0, %v236
    %v238 = vrot.slane %v127, %v237
    %v239 = vlaneseq
    %v240 = vshrl.u32 %v239, 7
    %v241 = vsub.s32 1, %v240
    %v242 = vrot.slane %v127, %v241
    %v243 = vlaneseq
    %v244 = vshrl.u32 %v243, 7
    %v245 = vsub.s32 2, %v244
    %v246 = vrot.slane %v127, %v245
    %v247 = vlaneseq
    %v248 = vshrl.u32 %v247, 7
    %v249 = vsub.s32 3, %v248
    %v250 = vrot.slane %v127, %v249
    %v251 = vlaneseq
    %v252 = vshrl.u32 %v251, 7
    %v253 = vsub.s32 0, %v252
    %v254 = vrot.slane %v128, %v253
    %v255 = vlaneseq
    %v256 = vshrl.u32 %v255, 7
    %v257 = vsub.s32 1, %v256
    %v258 = vrot.slane %v128, %v257
    %v259 = vlaneseq
    %v260 = vshrl.u32 %v259, 7
    %v261 = vsub.s32 2, %v260
    %v262 = vrot.slane %v128, %v261
    %v263 = vlaneseq
    %v264 = vshrl.u32 %v263, 7
    %v265 = vsub.s32 3, %v264
    %v266 = vrot.slane %v128, %v265
    %v267 = vlaneseq
    %v268 = vshrl.u32 %v267, 7
    %v269 = vsub.s32 0, %v268
    %v270 = vrot.slane %v129, %v269
    %v271 = vlaneseq
    %v272 = vshrl.u32 %v271, 7
    %v273 = vsub.s32 1, %v272
    %v274 = vrot.slane %v129, %v273
    %v275 = vlaneseq
    %v276 = vshrl.u32 %v275, 7
    %v277 = vsub.s32 2, %v276
    %v278 = vrot.slane %v129, %v277
    %v279 = vlaneseq
    %v280 = vshrl.u32 %v279, 7
    %v281 = vsub.s32 3, %v280
    %v282 = vrot.slane %v129, %v281
    %v319 = vld [vmem:[#allocation11] sm:$0xf]
    %v320 = vld [vmem:[#allocation11 + $0x4] sm:$0xf]
    %v321 = vld [vmem:[#allocation11 + $0x8] sm:$0xf]
    %v322 = vld [vmem:[#allocation11 + $0xc] sm:$0xf]
    %v323 = vld [vmem:[#allocation11 + $0x10] sm:$0xf]
    %v324 = vld [vmem:[#allocation11 + $0x14] sm:$0xf]
    %v325 = vld [vmem:[#allocation11 + $0x18] sm:$0xf]
    %v326 = vld [vmem:[#allocation11 + $0x1c] sm:$0xf]
    %v327 = vld [vmem:[#allocation11 + $0x20] sm:$0xf]
    %v337 = vlaneseq
    %v338 = vshrl.u32 %v337, 7
    %v339 = vsub.s32 0, %v338
    %v340 = vrot.slane %v319, %v339
    %v341 = vlaneseq
    %v342 = vshrl.u32 %v341, 7
    %v343 = vsub.s32 1, %v342
    %v344 = vrot.slane %v319, %v343
    %v345 = vlaneseq
    %v346 = vshrl.u32 %v345, 7
    %v347 = vsub.s32 2, %v346
    %v348 = vrot.slane %v319, %v347
    %v349 = vlaneseq
    %v350 = vshrl.u32 %v349, 7
    %v351 = vsub.s32 3, %v350
    %v352 = vrot.slane %v319, %v351
    %v353 = vlaneseq
    %v354 = vshrl.u32 %v353, 7
    %v355 = vsub.s32 0, %v354
    %v356 = vrot.slane %v320, %v355
    %v357 = vlaneseq
    %v358 = vshrl.u32 %v357, 7
    %v359 = vsub.s32 1, %v358
    %v360 = vrot.slane %v320, %v359
    %v361 = vlaneseq
    %v362 = vshrl.u32 %v361, 7
    %v363 = vsub.s32 2, %v362
    %v364 = vrot.slane %v320, %v363
    %v365 = vlaneseq
    %v366 = vshrl.u32 %v365, 7
    %v367 = vsub.s32 3, %v366
    %v368 = vrot.slane %v320, %v367
    %v369 = vlaneseq
    %v370 = vshrl.u32 %v369, 7
    %v371 = vsub.s32 0, %v370
    %v372 = vrot.slane %v321, %v371
    %v373 = vlaneseq
    %v374 = vshrl.u32 %v373, 7
    %v375 = vsub.s32 1, %v374
    %v376 = vrot.slane %v321, %v375
    %v377 = vlaneseq
    %v378 = vshrl.u32 %v377, 7
    %v379 = vsub.s32 2, %v378
    %v380 = vrot.slane %v321, %v379
    %v381 = vlaneseq
    %v382 = vshrl.u32 %v381, 7
    %v383 = vsub.s32 3, %v382
    %v384 = vrot.slane %v321, %v383
    %v385 = vlaneseq
    %v386 = vshrl.u32 %v385, 7
    %v387 = vsub.s32 0, %v386
    %v388 = vrot.slane %v322, %v387
    %v389 = vlaneseq
    %v390 = vshrl.u32 %v389, 7
    %v391 = vsub.s32 1, %v390
    %v392 = vrot.slane %v322, %v391
    %v393 = vlaneseq
    %v394 = vshrl.u32 %v393, 7
    %v395 = vsub.s32 2, %v394
    %v396 = vrot.slane %v322, %v395
    %v397 = vlaneseq
    %v398 = vshrl.u32 %v397, 7
    %v399 = vsub.s32 3, %v398
    %v400 = vrot.slane %v322, %v399
    %v401 = vlaneseq
    %v402 = vshrl.u32 %v401, 7
    %v403 = vsub.s32 0, %v402
    %v404 = vrot.slane %v323, %v403
    %v405 = vlaneseq
    %v406 = vshrl.u32 %v405, 7
    %v407 = vsub.s32 1, %v406
    %v408 = vrot.slane %v323, %v407
    %v409 = vlaneseq
    %v410 = vshrl.u32 %v409, 7
    %v411 = vsub.s32 2, %v410
    %v412 = vrot.slane %v323, %v411
    %v413 = vlaneseq
    %v414 = vshrl.u32 %v413, 7
    %v415 = vsub.s32 3, %v414
    %v416 = vrot.slane %v323, %v415
    %v417 = vlaneseq
    %v418 = vshrl.u32 %v417, 7
    %v419 = vsub.s32 0, %v418
    %v420 = vrot.slane %v324, %v419
    %v421 = vlaneseq
    %v422 = vshrl.u32 %v421, 7
    %v423 = vsub.s32 1, %v422
    %v424 = vrot.slane %v324, %v423
    %v425 = vlaneseq
    %v426 = vshrl.u32 %v425, 7
    %v427 = vsub.s32 2, %v426
    %v428 = vrot.slane %v324, %v427
    %v429 = vlaneseq
    %v430 = vshrl.u32 %v429, 7
    %v431 = vsub.s32 3, %v430
    %v432 = vrot.slane %v324, %v431
    %v433 = vlaneseq
    %v434 = vshrl.u32 %v433, 7
    %v435 = vsub.s32 0, %v434
    %v436 = vrot.slane %v325, %v435
    %v437 = vlaneseq
    %v438 = vshrl.u32 %v437, 7
    %v439 = vsub.s32 1, %v438
    %v440 = vrot.slane %v325, %v439
    %v441 = vlaneseq
    %v442 = vshrl.u32 %v441, 7
    %v443 = vsub.s32 2, %v442
    %v444 = vrot.slane %v325, %v443
    %v445 = vlaneseq
    %v446 = vshrl.u32 %v445, 7
    %v447 = vsub.s32 3, %v446
    %v448 = vrot.slane %v325, %v447
    %v449 = vlaneseq
    %v450 = vshrl.u32 %v449, 7
    %v451 = vsub.s32 0, %v450
    %v452 = vrot.slane %v326, %v451
    %v453 = vlaneseq
    %v454 = vshrl.u32 %v453, 7
    %v455 = vsub.s32 1, %v454
    %v456 = vrot.slane %v326, %v455
    %v457 = vlaneseq
    %v458 = vshrl.u32 %v457, 7
    %v459 = vsub.s32 2, %v458
    %v460 = vrot.slane %v326, %v459
    %v461 = vlaneseq
    %v462 = vshrl.u32 %v461, 7
    %v463 = vsub.s32 3, %v462
    %v464 = vrot.slane %v326, %v463
    %v465 = vlaneseq
    %v466 = vshrl.u32 %v465, 7
    %v467 = vsub.s32 0, %v466
    %v468 = vrot.slane %v327, %v467
    %v469 = vlaneseq
    %v470 = vshrl.u32 %v469, 7
    %v471 = vsub.s32 1, %v470
    %v472 = vrot.slane %v327, %v471
    %v473 = vlaneseq
    %v474 = vshrl.u32 %v473, 7
    %v475 = vsub.s32 2, %v474
    %v476 = vrot.slane %v327, %v475
    %v477 = vlaneseq
    %v478 = vshrl.u32 %v477, 7
    %v479 = vsub.s32 3, %v478
    %v480 = vrot.slane %v327, %v479
    %v517 = vld [vmem:[#allocation5] sm:$0xff]
    %v518 = vld [vmem:[#allocation5 + $0x8] sm:$0xff]
    %v519 = vld [vmem:[#allocation5 + $0x10] sm:$0xff]
    %v520 = vld [vmem:[#allocation5 + $0x18] sm:$0xff]
    %v521 = vld [vmem:[#allocation5 + $0x20] sm:$0xff]
    %v522 = vld [vmem:[#allocation5 + $0x28] sm:$0xff]
    %v523 = vld [vmem:[#allocation5 + $0x30] sm:$0xff]
    %v524 = vld [vmem:[#allocation5 + $0x38] sm:$0xff]
    %v525 = vld [vmem:[#allocation5 + $0x40] sm:$0xff]
    %v526 = vld [vmem:[#allocation5 + $0x48] sm:$0xff]
    %v527 = vld [vmem:[#allocation5 + $0x50] sm:$0xff]
    %v528 = vld [vmem:[#allocation5 + $0x58] sm:$0xff]
    %v529 = vld [vmem:[#allocation5 + $0x60] sm:$0xff]
    %v530 = vld [vmem:[#allocation5 + $0x68] sm:$0xff]
    %v531 = vld [vmem:[#allocation5 + $0x70] sm:$0xff]
    %v532 = vld [vmem:[#allocation5 + $0x78] sm:$0xff]
    %v533 = vld [vmem:[#allocation5 + $0x80] sm:$0xff]
    %v534 = vld [vmem:[#allocation5 + $0x88] sm:$0xff]
    %v535 = vunpack.c.l.bf16 %v517
    %v536 = vunpack.c.h.bf16 %v517
    %v537 = vunpack.c.l.bf16 %v518
    %v538 = vunpack.c.h.bf16 %v518
    %v539 = vunpack.c.l.bf16 %v519
    %v540 = vunpack.c.h.bf16 %v519
    %v541 = vunpack.c.l.bf16 %v520
    %v542 = vunpack.c.h.bf16 %v520
    %v543 = vunpack.c.l.bf16 %v521
    %v544 = vunpack.c.h.bf16 %v521
    %v545 = vunpack.c.l.bf16 %v522
    %v546 = vunpack.c.h.bf16 %v522
    %v547 = vunpack.c.l.bf16 %v523
    %v548 = vunpack.c.h.bf16 %v523
    %v549 = vunpack.c.l.bf16 %v524
    %v550 = vunpack.c.h.bf16 %v524
    %v551 = vunpack.c.l.bf16 %v525
    %v552 = vunpack.c.h.bf16 %v525
    %v553 = vunpack.c.l.bf16 %v526
    %v554 = vunpack.c.h.bf16 %v526
    %v555 = vunpack.c.l.bf16 %v527
    %v556 = vunpack.c.h.bf16 %v527
    %v557 = vunpack.c.l.bf16 %v528
    %v558 = vunpack.c.h.bf16 %v528
    %v559 = vunpack.c.l.bf16 %v529
    %v560 = vunpack.c.h.bf16 %v529
    %v561 = vunpack.c.l.bf16 %v530
    %v562 = vunpack.c.h.bf16 %v530
    %v563 = vunpack.c.l.bf16 %v531
    %v564 = vunpack.c.h.bf16 %v531
    %v565 = vunpack.c.l.bf16 %v532
    %v566 = vunpack.c.h.bf16 %v532
    %v567 = vunpack.c.l.bf16 %v533
    %v568 = vunpack.c.h.bf16 %v533
    %v569 = vunpack.c.l.bf16 %v534
    %v570 = vunpack.c.h.bf16 %v534
    %v571 = vld [vmem:[#allocation7] sm:$0xff]
    %v572 = vld [vmem:[#allocation7 + $0x8] sm:$0xff]
    %v573 = vld [vmem:[#allocation7 + $0x10] sm:$0xff]
    %v574 = vld [vmem:[#allocation7 + $0x18] sm:$0xff]
    %v575 = vld [vmem:[#allocation7 + $0x20] sm:$0xff]
    %v576 = vld [vmem:[#allocation7 + $0x28] sm:$0xff]
    %v577 = vld [vmem:[#allocation7 + $0x30] sm:$0xff]
    %v578 = vld [vmem:[#allocation7 + $0x38] sm:$0xff]
    %v579 = vld [vmem:[#allocation7 + $0x40] sm:$0xff]
    %v580 = vld [vmem:[#allocation7 + $0x48] sm:$0xff]
    %v581 = vld [vmem:[#allocation7 + $0x50] sm:$0xff]
    %v582 = vld [vmem:[#allocation7 + $0x58] sm:$0xff]
    %v583 = vld [vmem:[#allocation7 + $0x60] sm:$0xff]
    %v584 = vld [vmem:[#allocation7 + $0x68] sm:$0xff]
    %v585 = vld [vmem:[#allocation7 + $0x70] sm:$0xff]
    %v586 = vld [vmem:[#allocation7 + $0x78] sm:$0xff]
    %v587 = vld [vmem:[#allocation7 + $0x80] sm:$0xff]
    %v588 = vld [vmem:[#allocation7 + $0x88] sm:$0xff]
    %v589 = vunpack.c.l.bf16 %v571
    %v590 = vunpack.c.h.bf16 %v571
    %v591 = vunpack.c.l.bf16 %v572
    %v592 = vunpack.c.h.bf16 %v572
    %v593 = vunpack.c.l.bf16 %v573
    %v594 = vunpack.c.h.bf16 %v573
    %v595 = vunpack.c.l.bf16 %v574
    %v596 = vunpack.c.h.bf16 %v574
    %v597 = vunpack.c.l.bf16 %v575
    %v598 = vunpack.c.h.bf16 %v575
    %v599 = vunpack.c.l.bf16 %v576
    %v600 = vunpack.c.h.bf16 %v576
    %v601 = vunpack.c.l.bf16 %v577
    %v602 = vunpack.c.h.bf16 %v577
    %v603 = vunpack.c.l.bf16 %v578
    %v604 = vunpack.c.h.bf16 %v578
    %v605 = vunpack.c.l.bf16 %v579
    %v606 = vunpack.c.h.bf16 %v579
    %v607 = vunpack.c.l.bf16 %v580
    %v608 = vunpack.c.h.bf16 %v580
    %v609 = vunpack.c.l.bf16 %v581
    %v610 = vunpack.c.h.bf16 %v581
    %v611 = vunpack.c.l.bf16 %v582
    %v612 = vunpack.c.h.bf16 %v582
    %v613 = vunpack.c.l.bf16 %v583
    %v614 = vunpack.c.h.bf16 %v583
    %v615 = vunpack.c.l.bf16 %v584
    %v616 = vunpack.c.h.bf16 %v584
    %v617 = vunpack.c.l.bf16 %v585
    %v618 = vunpack.c.h.bf16 %v585
    %v619 = vunpack.c.l.bf16 %v586
    %v620 = vunpack.c.h.bf16 %v586
    %v621 = vunpack.c.l.bf16 %v587
    %v622 = vunpack.c.h.bf16 %v587
    %v623 = vunpack.c.l.bf16 %v588
    %v624 = vunpack.c.h.bf16 %v588
    %v625 = vld [vmem:[#allocation8] sm:$0xff]
    %v626 = vld [vmem:[#allocation8 + $0x8] sm:$0xff]
    %v627 = vld [vmem:[#allocation8 + $0x10] sm:$0xff]
    %v628 = vld [vmem:[#allocation8 + $0x18] sm:$0xff]
    %v629 = vld [vmem:[#allocation8 + $0x20] sm:$0xff]
    %v630 = vld [vmem:[#allocation8 + $0x28] sm:$0xff]
    %v631 = vld [vmem:[#allocation8 + $0x30] sm:$0xff]
    %v632 = vld [vmem:[#allocation8 + $0x38] sm:$0xff]
    %v633 = vld [vmem:[#allocation8 + $0x40] sm:$0xff]
    %v634 = vld [vmem:[#allocation8 + $0x48] sm:$0xff]
    %v635 = vld [vmem:[#allocation8 + $0x50] sm:$0xff]
    %v636 = vld [vmem:[#allocation8 + $0x58] sm:$0xff]
    %v637 = vld [vmem:[#allocation8 + $0x60] sm:$0xff]
    %v638 = vld [vmem:[#allocation8 + $0x68] sm:$0xff]
    %v639 = vld [vmem:[#allocation8 + $0x70] sm:$0xff]
    %v640 = vld [vmem:[#allocation8 + $0x78] sm:$0xff]
    %v641 = vld [vmem:[#allocation8 + $0x80] sm:$0xff]
    %v642 = vld [vmem:[#allocation8 + $0x88] sm:$0xff]
    %v643 = vunpack.c.l.bf16 %v625
    %v644 = vunpack.c.h.bf16 %v625
    %v645 = vunpack.c.l.bf16 %v626
    %v646 = vunpack.c.h.bf16 %v626
    %v647 = vunpack.c.l.bf16 %v627
    %v648 = vunpack.c.h.bf16 %v627
    %v649 = vunpack.c.l.bf16 %v628
    %v650 = vunpack.c.h.bf16 %v628
    %v651 = vunpack.c.l.bf16 %v629
    %v652 = vunpack.c.h.bf16 %v629
    %v653 = vunpack.c.l.bf16 %v630
    %v654 = vunpack.c.h.bf16 %v630
    %v655 = vunpack.c.l.bf16 %v631
    %v656 = vunpack.c.h.bf16 %v631
    %v657 = vunpack.c.l.bf16 %v632
    %v658 = vunpack.c.h.bf16 %v632
    %v659 = vunpack.c.l.bf16 %v633
    %v660 = vunpack.c.h.bf16 %v633
    %v661 = vunpack.c.l.bf16 %v634
    %v662 = vunpack.c.h.bf16 %v634
    %v663 = vunpack.c.l.bf16 %v635
    %v664 = vunpack.c.h.bf16 %v635
    %v665 = vunpack.c.l.bf16 %v636
    %v666 = vunpack.c.h.bf16 %v636
    %v667 = vunpack.c.l.bf16 %v637
    %v668 = vunpack.c.h.bf16 %v637
    %v669 = vunpack.c.l.bf16 %v638
    %v670 = vunpack.c.h.bf16 %v638
    %v671 = vunpack.c.l.bf16 %v639
    %v672 = vunpack.c.h.bf16 %v639
    %v673 = vunpack.c.l.bf16 %v640
    %v674 = vunpack.c.h.bf16 %v640
    %v675 = vunpack.c.l.bf16 %v641
    %v676 = vunpack.c.h.bf16 %v641
    %v677 = vunpack.c.l.bf16 %v642
    %v678 = vunpack.c.h.bf16 %v642
    %v679 = vld [vmem:[#allocation10] sm:$0xff]
    %v680 = vld [vmem:[#allocation10 + $0x8] sm:$0xff]
    %v681 = vld [vmem:[#allocation10 + $0x10] sm:$0xff]
    %v682 = vld [vmem:[#allocation10 + $0x18] sm:$0xff]
    %v683 = vld [vmem:[#allocation10 + $0x20] sm:$0xff]
    %v684 = vld [vmem:[#allocation10 + $0x28] sm:$0xff]
    %v685 = vld [vmem:[#allocation10 + $0x30] sm:$0xff]
    %v686 = vld [vmem:[#allocation10 + $0x38] sm:$0xff]
    %v687 = vld [vmem:[#allocation10 + $0x40] sm:$0xff]
    %v688 = vld [vmem:[#allocation10 + $0x48] sm:$0xff]
    %v689 = vld [vmem:[#allocation10 + $0x50] sm:$0xff]
    %v690 = vld [vmem:[#allocation10 + $0x58] sm:$0xff]
    %v691 = vld [vmem:[#allocation10 + $0x60] sm:$0xff]
    %v692 = vld [vmem:[#allocation10 + $0x68] sm:$0xff]
    %v693 = vld [vmem:[#allocation10 + $0x70] sm:$0xff]
    %v694 = vld [vmem:[#allocation10 + $0x78] sm:$0xff]
    %v695 = vld [vmem:[#allocation10 + $0x80] sm:$0xff]
    %v696 = vld [vmem:[#allocation10 + $0x88] sm:$0xff]
    %v697 = vunpack.c.l.bf16 %v679
    %v698 = vunpack.c.h.bf16 %v679
    %v699 = vunpack.c.l.bf16 %v680
    %v700 = vunpack.c.h.bf16 %v680
    %v701 = vunpack.c.l.bf16 %v681
    %v702 = vunpack.c.h.bf16 %v681
    %v703 = vunpack.c.l.bf16 %v682
    %v704 = vunpack.c.h.bf16 %v682
    %v705 = vunpack.c.l.bf16 %v683
    %v706 = vunpack.c.h.bf16 %v683
    %v707 = vunpack.c.l.bf16 %v684
    %v708 = vunpack.c.h.bf16 %v684
    %v709 = vunpack.c.l.bf16 %v685
    %v710 = vunpack.c.h.bf16 %v685
    %v711 = vunpack.c.l.bf16 %v686
    %v712 = vunpack.c.h.bf16 %v686
    %v713 = vunpack.c.l.bf16 %v687
    %v714 = vunpack.c.h.bf16 %v687
    %v715 = vunpack.c.l.bf16 %v688
    %v716 = vunpack.c.h.bf16 %v688
    %v717 = vunpack.c.l.bf16 %v689
    %v718 = vunpack.c.h.bf16 %v689
    %v719 = vunpack.c.l.bf16 %v690
    %v720 = vunpack.c.h.bf16 %v690
    %v721 = vunpack.c.l.bf16 %v691
    %v722 = vunpack.c.h.bf16 %v691
    %v723 = vunpack.c.l.bf16 %v692
    %v724 = vunpack.c.h.bf16 %v692
    %v725 = vunpack.c.l.bf16 %v693
    %v726 = vunpack.c.h.bf16 %v693
    %v727 = vunpack.c.l.bf16 %v694
    %v728 = vunpack.c.h.bf16 %v694
    %v729 = vunpack.c.l.bf16 %v695
    %v730 = vunpack.c.h.bf16 %v695
    %v731 = vunpack.c.l.bf16 %v696
    %v732 = vunpack.c.h.bf16 %v696
    %v733 = vsub.f32 %v589, %v535
    %v734 = vsub.f32 %v590, %v536
    %v735 = vsub.f32 %v591, %v537
    %v736 = vsub.f32 %v592, %v538
    %v737 = vsub.f32 %v593, %v539
    %v738 = vsub.f32 %v594, %v540
    %v739 = vsub.f32 %v595, %v541
    %v740 = vsub.f32 %v596, %v542
    %v741 = vsub.f32 %v597, %v543
    %v742 = vsub.f32 %v598, %v544
    %v743 = vsub.f32 %v599, %v545
    %v744 = vsub.f32 %v600, %v546
    %v745 = vsub.f32 %v601, %v547
    %v746 = vsub.f32 %v602, %v548
    %v747 = vsub.f32 %v603, %v549
    %v748 = vsub.f32 %v604, %v550
    %v749 = vsub.f32 %v605, %v551
    %v750 = vsub.f32 %v606, %v552
    %v751 = vsub.f32 %v607, %v553
    %v752 = vsub.f32 %v608, %v554
    %v753 = vsub.f32 %v609, %v555
    %v754 = vsub.f32 %v610, %v556
    %v755 = vsub.f32 %v611, %v557
    %v756 = vsub.f32 %v612, %v558
    %v757 = vsub.f32 %v613, %v559
    %v758 = vsub.f32 %v614, %v560
    %v759 = vsub.f32 %v615, %v561
    %v760 = vsub.f32 %v616, %v562
    %v761 = vsub.f32 %v617, %v563
    %v762 = vsub.f32 %v618, %v564
    %v763 = vsub.f32 %v619, %v565
    %v764 = vsub.f32 %v620, %v566
    %v765 = vsub.f32 %v621, %v567
    %v766 = vsub.f32 %v622, %v568
    %v767 = vsub.f32 %v623, %v569
    %v768 = vsub.f32 %v624, %v570
    %v769 = vmul.f32 %v142, %v733
    %v770 = vmul.f32 %v146, %v734
    %v771 = vmul.f32 %v150, %v735
    %v772 = vmul.f32 %v154, %v736
    %v773 = vmul.f32 %v158, %v737
    %v774 = vmul.f32 %v162, %v738
    %v775 = vmul.f32 %v166, %v739
    %v776 = vmul.f32 %v170, %v740
    %v777 = vmul.f32 %v174, %v741
    %v778 = vmul.f32 %v178, %v742
    %v779 = vmul.f32 %v182, %v743
    %v780 = vmul.f32 %v186, %v744
    %v781 = vmul.f32 %v190, %v745
    %v782 = vmul.f32 %v194, %v746
    %v783 = vmul.f32 %v198, %v747
    %v784 = vmul.f32 %v202, %v748
    %v785 = vmul.f32 %v206, %v749
    %v786 = vmul.f32 %v210, %v750
    %v787 = vmul.f32 %v214, %v751
    %v788 = vmul.f32 %v218, %v752
    %v789 = vmul.f32 %v222, %v753
    %v790 = vmul.f32 %v226, %v754
    %v791 = vmul.f32 %v230, %v755
    %v792 = vmul.f32 %v234, %v756
    %v793 = vmul.f32 %v238, %v757
    %v794 = vmul.f32 %v242, %v758
    %v795 = vmul.f32 %v246, %v759
    %v796 = vmul.f32 %v250, %v760
    %v797 = vmul.f32 %v254, %v761
    %v798 = vmul.f32 %v258, %v762
    %v799 = vmul.f32 %v262, %v763
    %v800 = vmul.f32 %v266, %v764
    %v801 = vmul.f32 %v270, %v765
    %v802 = vmul.f32 %v274, %v766
    %v803 = vmul.f32 %v278, %v767
    %v804 = vmul.f32 %v282, %v768
    %v805 = vadd.f32 %v535, %v769
    %v806 = vadd.f32 %v536, %v770
    %v807 = vadd.f32 %v537, %v771
    %v808 = vadd.f32 %v538, %v772
    %v809 = vadd.f32 %v539, %v773
    %v810 = vadd.f32 %v540, %v774
    %v811 = vadd.f32 %v541, %v775
    %v812 = vadd.f32 %v542, %v776
    %v813 = vadd.f32 %v543, %v777
    %v814 = vadd.f32 %v544, %v778
    %v815 = vadd.f32 %v545, %v779
    %v816 = vadd.f32 %v546, %v780
    %v817 = vadd.f32 %v547, %v781
    %v818 = vadd.f32 %v548, %v782
    %v819 = vadd.f32 %v549, %v783
    %v820 = vadd.f32 %v550, %v784
    %v821 = vadd.f32 %v551, %v785
    %v822 = vadd.f32 %v552, %v786
    %v823 = vadd.f32 %v553, %v787
    %v824 = vadd.f32 %v554, %v788
    %v825 = vadd.f32 %v555, %v789
    %v826 = vadd.f32 %v556, %v790
    %v827 = vadd.f32 %v557, %v791
    %v828 = vadd.f32 %v558, %v792
    %v829 = vadd.f32 %v559, %v793
    %v830 = vadd.f32 %v560, %v794
    %v831 = vadd.f32 %v561, %v795
    %v832 = vadd.f32 %v562, %v796
    %v833 = vadd.f32 %v563, %v797
    %v834 = vadd.f32 %v564, %v798
    %v835 = vadd.f32 %v565, %v799
    %v836 = vadd.f32 %v566, %v800
    %v837 = vadd.f32 %v567, %v801
    %v838 = vadd.f32 %v568, %v802
    %v839 = vadd.f32 %v569, %v803
    %v840 = vadd.f32 %v570, %v804
    %v841 = vsub.f32 %v697, %v643
    %v842 = vsub.f32 %v698, %v644
    %v843 = vsub.f32 %v699, %v645
    %v844 = vsub.f32 %v700, %v646
    %v845 = vsub.f32 %v701, %v647
    %v846 = vsub.f32 %v702, %v648
    %v847 = vsub.f32 %v703, %v649
    %v848 = vsub.f32 %v704, %v650
    %v849 = vsub.f32 %v705, %v651
    %v850 = vsub.f32 %v706, %v652
    %v851 = vsub.f32 %v707, %v653
    %v852 = vsub.f32 %v708, %v654
    %v853 = vsub.f32 %v709, %v655
    %v854 = vsub.f32 %v710, %v656
    %v855 = vsub.f32 %v711, %v657
    %v856 = vsub.f32 %v712, %v658
    %v857 = vsub.f32 %v713, %v659
    %v858 = vsub.f32 %v714, %v660
    %v859 = vsub.f32 %v715, %v661
    %v860 = vsub.f32 %v716, %v662
    %v861 = vsub.f32 %v717, %v663
    %v862 = vsub.f32 %v718, %v664
    %v863 = vsub.f32 %v719, %v665
    %v864 = vsub.f32 %v720, %v666
    %v865 = vsub.f32 %v721, %v667
    %v866 = vsub.f32 %v722, %v668
    %v867 = vsub.f32 %v723, %v669
    %v868 = vsub.f32 %v724, %v670
    %v869 = vsub.f32 %v725, %v671
    %v870 = vsub.f32 %v726, %v672
    %v871 = vsub.f32 %v727, %v673
    %v872 = vsub.f32 %v728, %v674
    %v873 = vsub.f32 %v729, %v675
    %v874 = vsub.f32 %v730, %v676
    %v875 = vsub.f32 %v731, %v677
    %v876 = vsub.f32 %v732, %v678
    %v877 = vmul.f32 %v142, %v841
    %v878 = vmul.f32 %v146, %v842
    %v879 = vmul.f32 %v150, %v843
    %v880 = vmul.f32 %v154, %v844
    %v881 = vmul.f32 %v158, %v845
    %v882 = vmul.f32 %v162, %v846
    %v883 = vmul.f32 %v166, %v847
    %v884 = vmul.f32 %v170, %v848
    %v885 = vmul.f32 %v174, %v849
    %v886 = vmul.f32 %v178, %v850
    %v887 = vmul.f32 %v182, %v851
    %v888 = vmul.f32 %v186, %v852
    %v889 = vmul.f32 %v190, %v853
    %v890 = vmul.f32 %v194, %v854
    %v891 = vmul.f32 %v198, %v855
    %v892 = vmul.f32 %v202, %v856
    %v893 = vmul.f32 %v206, %v857
    %v894 = vmul.f32 %v210, %v858
    %v895 = vmul.f32 %v214, %v859
    %v896 = vmul.f32 %v218, %v860
    %v897 = vmul.f32 %v222, %v861
    %v898 = vmul.f32 %v226, %v862
    %v899 = vmul.f32 %v230, %v863
    %v900 = vmul.f32 %v234, %v864
    %v901 = vmul.f32 %v238, %v865
    %v902 = vmul.f32 %v242, %v866
    %v903 = vmul.f32 %v246, %v867
    %v904 = vmul.f32 %v250, %v868
    %v905 = vmul.f32 %v254, %v869
    %v906 = vmul.f32 %v258, %v870
    %v907 = vmul.f32 %v262, %v871
    %v908 = vmul.f32 %v266, %v872
    %v909 = vmul.f32 %v270, %v873
    %v910 = vmul.f32 %v274, %v874
    %v911 = vmul.f32 %v278, %v875
    %v912 = vmul.f32 %v282, %v876
    %v913 = vadd.f32 %v643, %v877
    %v914 = vadd.f32 %v644, %v878
    %v915 = vadd.f32 %v645, %v879
    %v916 = vadd.f32 %v646, %v880
    %v917 = vadd.f32 %v647, %v881
    %v918 = vadd.f32 %v648, %v882
    %v919 = vadd.f32 %v649, %v883
    %v920 = vadd.f32 %v650, %v884
    %v921 = vadd.f32 %v651, %v885
    %v922 = vadd.f32 %v652, %v886
    %v923 = vadd.f32 %v653, %v887
    %v924 = vadd.f32 %v654, %v888
    %v925 = vadd.f32 %v655, %v889
    %v926 = vadd.f32 %v656, %v890
    %v927 = vadd.f32 %v657, %v891
    %v928 = vadd.f32 %v658, %v892
    %v929 = vadd.f32 %v659, %v893
    %v930 = vadd.f32 %v660, %v894
    %v931 = vadd.f32 %v661, %v895
    %v932 = vadd.f32 %v662, %v896
    %v933 = vadd.f32 %v663, %v897
    %v934 = vadd.f32 %v664, %v898
    %v935 = vadd.f32 %v665, %v899
    %v936 = vadd.f32 %v666, %v900
    %v937 = vadd.f32 %v667, %v901
    %v938 = vadd.f32 %v668, %v902
    %v939 = vadd.f32 %v669, %v903
    %v940 = vadd.f32 %v670, %v904
    %v941 = vadd.f32 %v671, %v905
    %v942 = vadd.f32 %v672, %v906
    %v943 = vadd.f32 %v673, %v907
    %v944 = vadd.f32 %v674, %v908
    %v945 = vadd.f32 %v675, %v909
    %v946 = vadd.f32 %v676, %v910
    %v947 = vadd.f32 %v677, %v911
    %v948 = vadd.f32 %v678, %v912
    %v949 = vsub.f32 %v913, %v805
    %v950 = vsub.f32 %v914, %v806
    %v951 = vsub.f32 %v915, %v807
    %v952 = vsub.f32 %v916, %v808
    %v953 = vsub.f32 %v917, %v809
    %v954 = vsub.f32 %v918, %v810
    %v955 = vsub.f32 %v919, %v811
    %v956 = vsub.f32 %v920, %v812
    %v957 = vsub.f32 %v921, %v813
    %v958 = vsub.f32 %v922, %v814
    %v959 = vsub.f32 %v923, %v815
    %v960 = vsub.f32 %v924, %v816
    %v961 = vsub.f32 %v925, %v817
    %v962 = vsub.f32 %v926, %v818
    %v963 = vsub.f32 %v927, %v819
    %v964 = vsub.f32 %v928, %v820
    %v965 = vsub.f32 %v929, %v821
    %v966 = vsub.f32 %v930, %v822
    %v967 = vsub.f32 %v931, %v823
    %v968 = vsub.f32 %v932, %v824
    %v969 = vsub.f32 %v933, %v825
    %v970 = vsub.f32 %v934, %v826
    %v971 = vsub.f32 %v935, %v827
    %v972 = vsub.f32 %v936, %v828
    %v973 = vsub.f32 %v937, %v829
    %v974 = vsub.f32 %v938, %v830
    %v975 = vsub.f32 %v939, %v831
    %v976 = vsub.f32 %v940, %v832
    %v977 = vsub.f32 %v941, %v833
    %v978 = vsub.f32 %v942, %v834
    %v979 = vsub.f32 %v943, %v835
    %v980 = vsub.f32 %v944, %v836
    %v981 = vsub.f32 %v945, %v837
    %v982 = vsub.f32 %v946, %v838
    %v983 = vsub.f32 %v947, %v839
    %v984 = vsub.f32 %v948, %v840
    %v985 = vmul.f32 %v340, %v949
    %v986 = vmul.f32 %v344, %v950
    %v987 = vmul.f32 %v348, %v951
    %v988 = vmul.f32 %v352, %v952
    %v989 = vmul.f32 %v356, %v953
    %v990 = vmul.f32 %v360, %v954
    %v991 = vmul.f32 %v364, %v955
    %v992 = vmul.f32 %v368, %v956
    %v993 = vmul.f32 %v372, %v957
    %v994 = vmul.f32 %v376, %v958
    %v995 = vmul.f32 %v380, %v959
    %v996 = vmul.f32 %v384, %v960
    %v997 = vmul.f32 %v388, %v961
    %v998 = vmul.f32 %v392, %v962
    %v999 = vmul.f32 %v396, %v963
    %v1000 = vmul.f32 %v400, %v964
    %v1001 = vmul.f32 %v404, %v965
    %v1002 = vmul.f32 %v408, %v966
    %v1003 = vmul.f32 %v412, %v967
    %v1004 = vmul.f32 %v416, %v968
    %v1005 = vmul.f32 %v420, %v969
    %v1006 = vmul.f32 %v424, %v970
    %v1007 = vmul.f32 %v428, %v971
    %v1008 = vmul.f32 %v432, %v972
    %v1009 = vmul.f32 %v436, %v973
    %v1010 = vmul.f32 %v440, %v974
    %v1011 = vmul.f32 %v444, %v975
    %v1012 = vmul.f32 %v448, %v976
    %v1013 = vmul.f32 %v452, %v977
    %v1014 = vmul.f32 %v456, %v978
    %v1015 = vmul.f32 %v460, %v979
    %v1016 = vmul.f32 %v464, %v980
    %v1017 = vmul.f32 %v468, %v981
    %v1018 = vmul.f32 %v472, %v982
    %v1019 = vmul.f32 %v476, %v983
    %v1020 = vmul.f32 %v480, %v984
    %v1021 = vadd.f32 %v805, %v985
    %v1022 = vadd.f32 %v806, %v986
    %v1023 = vadd.f32 %v807, %v987
    %v1024 = vadd.f32 %v808, %v988
    %v1025 = vadd.f32 %v809, %v989
    %v1026 = vadd.f32 %v810, %v990
    %v1027 = vadd.f32 %v811, %v991
    %v1028 = vadd.f32 %v812, %v992
    %v1029 = vadd.f32 %v813, %v993
    %v1030 = vadd.f32 %v814, %v994
    %v1031 = vadd.f32 %v815, %v995
    %v1032 = vadd.f32 %v816, %v996
    %v1033 = vadd.f32 %v817, %v997
    %v1034 = vadd.f32 %v818, %v998
    %v1035 = vadd.f32 %v819, %v999
    %v1036 = vadd.f32 %v820, %v1000
    %v1037 = vadd.f32 %v821, %v1001
    %v1038 = vadd.f32 %v822, %v1002
    %v1039 = vadd.f32 %v823, %v1003
    %v1040 = vadd.f32 %v824, %v1004
    %v1041 = vadd.f32 %v825, %v1005
    %v1042 = vadd.f32 %v826, %v1006
    %v1043 = vadd.f32 %v827, %v1007
    %v1044 = vadd.f32 %v828, %v1008
    %v1045 = vadd.f32 %v829, %v1009
    %v1046 = vadd.f32 %v830, %v1010
    %v1047 = vadd.f32 %v831, %v1011
    %v1048 = vadd.f32 %v832, %v1012
    %v1049 = vadd.f32 %v833, %v1013
    %v1050 = vadd.f32 %v834, %v1014
    %v1051 = vadd.f32 %v835, %v1015
    %v1052 = vadd.f32 %v836, %v1016
    %v1053 = vadd.f32 %v837, %v1017
    %v1054 = vadd.f32 %v838, %v1018
    %v1055 = vadd.f32 %v839, %v1019
    %v1056 = vadd.f32 %v840, %v1020
    %v1057 = vld [vmem:[#allocation2] sm:$0xf]
    %v1058 = vpack.c.bf16 %v1025, %v1021
    %v1059 = vpack.c.bf16 %v1026, %v1022
    %v1060 = vpack.c.bf16 %v1027, %v1023
    %v1061 = vpack.c.bf16 %v1028, %v1024
    %v1062 = vpack.c.bf16 %v1033, %v1029
    %v1063 = vpack.c.bf16 %v1034, %v1030
    %v1064 = vpack.c.bf16 %v1035, %v1031
    %v1065 = vpack.c.bf16 %v1036, %v1032
    %v1066 = vpack.c.bf16 %v1041, %v1037
    %v1067 = vpack.c.bf16 %v1042, %v1038
    %v1068 = vpack.c.bf16 %v1043, %v1039
    %v1069 = vpack.c.bf16 %v1044, %v1040
    %v1070 = vpack.c.bf16 %v1049, %v1045
    %v1071 = vpack.c.bf16 %v1050, %v1046
    %v1072 = vpack.c.bf16 %v1051, %v1047
    %v1073 = vpack.c.bf16 %v1052, %v1048
    %v1074 = vpack.c.bf16 %v1053, %v1053
    %v1075 = vpack.c.bf16 %v1054, %v1054
    %v1076 = vpack.c.bf16 %v1055, %v1055
    %v1077 = vpack.c.bf16 %v1056, %v1056
    %vm1078 = vcmask 588800
    %v1080 = vsel %vm1078, %v1057, 0
    %vm1082 = vcmask 1043456
    %v1084 = vsel %vm1082, %v1074, 0
    %v1087 = vsel %vm1082, %v1075, 0
    %v1090 = vsel %vm1082, %v1076, 0
    %v1093 = vsel %vm1082, %v1077, 0
    %1095 = vmatprep.subr.bf16.mxu0 %v1059
    %1096 = vmatpush1.bf16.msra.mxu0 %v1058
    %1097 = vmatprep.subr.bf16.mxu0 %v1063
    %1098 = vmatpush1.bf16.msra.mxu0 %v1062
    %1099 = vmatprep.subr.bf16.mxu0 %v1067
    %1100 = vmatpush1.bf16.msra.mxu0 %v1066
    %1101 = vmatprep.subr.bf16.mxu0 %v1071
    %1102 = vmatpush1.bf16.msra.mxu0 %v1070
    %1103 = vmatprep.subr.bf16.mxu0 %v1087
    %1104 = vmatpush1.bf16.msra.mxu0 %v1084
    %1105 = vmatprep.subr.bf16.mxu0 0
    %1106 = vmatpush1.bf16.msra.mxu0 0
    %1107 = vmatprep.subr.bf16.mxu0 0
    %1108 = vmatpush1.bf16.msra.mxu0 0
    %1109 = vmatprep.subr.bf16.mxu0 0
    %1110 = vmatpush1.bf16.msra.mxu0 0
    %1111 = vmatprep.subr.bf16.mxu0 0
    %1112 = vmatpush1.bf16.msra.mxu0 0
    %1113 = vmatprep.subr.bf16.mxu0 0
    %1114 = vmatpush1.bf16.msra.mxu0 0
    %1115 = vmatprep.subr.bf16.mxu0 0
    %1116 = vmatpush1.bf16.msra.mxu0 0
    %1117 = vmatprep.subr.bf16.mxu0 0
    %1118 = vmatpush1.bf16.msra.mxu0 0
    %1119 = vmatprep.subr.bf16.mxu0 0
    %1120 = vmatpush1.bf16.msra.mxu0 0
    %1121 = vmatprep.subr.bf16.mxu0 0
    %1122 = vmatpush1.bf16.msra.mxu0 0
    %1123 = vmatprep.subr.bf16.mxu0 0
    %1124 = vmatpush1.bf16.msra.mxu0 0
    %1125 = vmatprep.subr.bf16.mxu0 0
    %1126 = vmatpush1.bf16.msra.mxu0 0
    %1127 = vmatprep.mubr.bf16.mxu0 0
    %1128 = vmatmul.mubr.bf16.gmra.mrb[0].mxu0 %v1080
    %v1129 = vpop.f32.mrb[0].mxu0
    %v1130 = vadd.f32 0.0, %v1129
    %v1131 = vpop.f32.mrb[0].mxu0
    %v1132 = vadd.f32 0.0, %v1131
    %v1133 = vpop.f32.mrb[0].mxu0
    %v1134 = vpop.f32.mrb[0].mxu0
    %1135 = vdwg.mxu0
    %1136 = vmatprep.subr.bf16.mxu0 %v1061
    %1137 = vmatpush1.bf16.msra.mxu0 %v1060
    %1138 = vmatprep.subr.bf16.mxu0 %v1065
    %1139 = vmatpush1.bf16.msra.mxu0 %v1064
    %1140 = vmatprep.subr.bf16.mxu0 %v1069
    %1141 = vmatpush1.bf16.msra.mxu0 %v1068
    %1142 = vmatprep.subr.bf16.mxu0 %v1073
    %1143 = vmatpush1.bf16.msra.mxu0 %v1072
    %1144 = vmatprep.subr.bf16.mxu0 %v1093
    %1145 = vmatpush1.bf16.msra.mxu0 %v1090
    %1146 = vmatprep.subr.bf16.mxu0 0
    %1147 = vmatpush1.bf16.msra.mxu0 0
    %1148 = vmatprep.subr.bf16.mxu0 0
    %1149 = vmatpush1.bf16.msra.mxu0 0
    %1150 = vmatprep.subr.bf16.mxu0 0
    %1151 = vmatpush1.bf16.msra.mxu0 0
    %1152 = vmatprep.subr.bf16.mxu0 0
    %1153 = vmatpush1.bf16.msra.mxu0 0
    %1154 = vmatprep.subr.bf16.mxu0 0
    %1155 = vmatpush1.bf16.msra.mxu0 0
    %1156 = vmatprep.subr.bf16.mxu0 0
    %1157 = vmatpush1.bf16.msra.mxu0 0
    %1158 = vmatprep.subr.bf16.mxu0 0
    %1159 = vmatpush1.bf16.msra.mxu0 0
    %1160 = vmatprep.subr.bf16.mxu0 0
    %1161 = vmatpush1.bf16.msra.mxu0 0
    %1162 = vmatprep.subr.bf16.mxu0 0
    %1163 = vmatpush1.bf16.msra.mxu0 0
    %1164 = vmatprep.subr.bf16.mxu0 0
    %1165 = vmatpush1.bf16.msra.mxu0 0
    %1166 = vmatprep.subr.bf16.mxu0 0
    %1167 = vmatpush1.bf16.msra.mxu0 0
    %1168 = vmatprep.mubr.bf16.mxu0 0
    %1169 = vmatmul.mubr.bf16.gmra.mrb[0].mxu0 %v1080
    %v1170 = vpop.f32.mrb[0].mxu0
    %v1171 = vadd.f32 0.0, %v1170
    %v1172 = vpop.f32.mrb[0].mxu0
    %v1173 = vadd.f32 0.0, %v1172
    %v1174 = vpop.f32.mrb[0].mxu0
    %v1175 = vpop.f32.mrb[0].mxu0
    %1176 = vdwg.mxu0
    %1177 = vst [vmem:[#allocation14] sm:$0xff] %v1130
    %1178 = vst [vmem:[#allocation14 + $0x8] sm:$0xff] %v1132
    %1179 = vst [vmem:[#allocation14 + $0x10] sm:$0xff] %v1171
    %1180 = vst [vmem:[#allocation14 + $0x18] sm:$0xff] %v1173
    // Predicated region
    $region58: #{tpu_custom_call.1} parent=1 // pred_check
      _
    $region59: #{tpu_custom_call.1} parent=1 // pred_check_branch
      %1182 = sbr.rel (0) target = $region61
    $region60: #{tpu_custom_call.1} parent=1 // pred_region
      %s1184 = ssub.s32 512, 512
      %1185 = vsyncadd [#allocation4], %s1184
      %s1187 = sshll.u32 [#allocation14], 4
      %s1188 = int_to_ptr.vmem [resolvable:$true] %s1187
      %1190 = dma.vmem_to_hbm [thread:$0]  %s1188, 512, %s7, [#allocation4]
    $region61: #{tpu_custom_call.1} parent=1 // pred_fallthru
      _
    // Predicated region
    $region62: #{tpu_custom_call.1} parent=1 // pred_check
      _
    $region63: #{tpu_custom_call.1} parent=1 // pred_check_branch
      %1192 = sbr.rel (0) target = $region65
    $region64: #{tpu_custom_call.1} parent=1 // pred_region
      %1193 = dma.done [#allocation4], 512
    $region65: #{tpu_custom_call.1} parent=1 // pred_fallthru
      _
    %1194 = vsyncpa [#allocation3], 1
    %1195 = vsyncpa [#allocation6], 1
    %1196 = vsyncpa [#allocation9], 1
    %1197 = vsyncpa [#allocation12], 1
    %1198 = vsyncpa [#allocation4], 1

</llo_original>
